<compile_context>
chip_gen: v6e
topology: v6e:2x2x1
jax: 0.10.0
libtpu: 0.0.40
codegen_flags: <defaults>
</compile_context>

<pallas_src>
import functools
import math

import jax
import jax.numpy as jnp
from jax.experimental import pallas as pl
from jax.experimental.pallas import tpu as pltpu


def _cdiv(a, b):
    return -(-a // b)


def _round_up(x, m):
    return _cdiv(x, m) * m


def _round_down(x, m):
    return (x // m) * m


# ---------------------------------------------------------------------------------------
# Tiling heuristics (kernel is HBM-bandwidth bound; VMEM is the tile-size constraint).
# ---------------------------------------------------------------------------------------
_VMEM_WORKSET_BUDGET = 24 * 1024 * 1024   # per-step working-set target; safe on v5e/v6e/v7x
_H_CHUNK_LIMIT = 2 * 1024 * 1024          # max live (C*Bt, Dqp) h temp before chunking over C
_MIN_X_TILE_BYTES = 256 * 1024            # amortize ~0.35us/step grid overhead
_TARGET_STEPS = 4                         # >=2 for v7x megacore, >=4 for pipeline overlap


def _per_row_vmem_bytes(C, Hpv, Dqp, h_rows):
    """f32 VMEM working-set bytes per row of b_tile (lane-padded footprints)."""
    return 4 * (
        2 * C * Hpv        # x tile (double-buffered by the BlockSpec pipeline)
        + 2 * Hpv          # out tile (double-buffered)
        + C * Hpv          # attn * x product temp
        + h_rows * Dqp     # live h = tanh(x @ w1 + b1) rows (C if unchunked, 1 if chunked)
        + 3 * C * 128      # score/softmax slabs (lane width 1 -> still full 128-lane vregs)
    )


def _fixed_vmem_bytes(H, Dqp):
    # w1/b1/w2 are double-buffered despite constant index maps -> count them at 2x.
    return 4 * 2 * (_round_up(H, 8) * Dqp + 2 * 8 * Dqp)


# ---------------------------------------------------------------------------------------
# Kernel
# ---------------------------------------------------------------------------------------
def attention_query_kernel(x_ref, w1_ref, b1_ref, w2_ref, o_ref, *, chunk_c):
    """Fused 'query'-attention forward for one B tile.

    x_ref : (C, B_tile, H)   inputs (H unpadded -> no HBM inflation)
    w1_ref: (H, Dqp)         first Linear weight (transposed, Dq zero-padded to 128)
    b1_ref: (1, Dqp)         first Linear bias (zero-padded)
    w2_ref: (1, Dqp)         second Linear weight row (no bias, zero-padded)
    o_ref : (B_tile, H)      output = (softmax_C(score) * x).sum over C
    """
    x = x_ref[...].astype(jnp.float32)               # (C, Bt, H); bf16 inputs upcast here
    C, Bt, H = x.shape
    w1 = w1_ref[...].astype(jnp.float32)             # (H, Dqp)
    b1 = b1_ref[...]                                  # (1, Dqp)
    w2 = w2_ref[...]                                  # (1, Dqp)
    prec = jax.lax.Precision.HIGHEST                  # keep the f32 numerics gate honest

    # --- score = Linear2(tanh(Linear1(x))) ------------------------------------------
    if not chunk_c:
        # Single 2-D MXU matmul over the flattened (C*Bt) rows.
        h = jnp.tanh(jnp.dot(x.reshape(C * Bt, H), w1,
                             precision=prec, preferred_element_type=jnp.float32) + b1)
        # Dq -> 1 projection as a VPU multiply + lane reduce (padded Dq cols contribute 0).
        s = jnp.sum(h * w2, axis=-1, keepdims=True).reshape(C, Bt, 1)   # (C, Bt, 1)
    else:
        # Bound the live h temp to (Bt, Dqp): per-C-slice matmul + score reduce.
        scores = []
        for c in range(C):                            # C is a small static set size
            h_c = jnp.tanh(jnp.dot(x[c], w1,
                                   precision=prec, preferred_element_type=jnp.float32) + b1)
            scores.append(jnp.sum(h_c * w2, axis=-1, keepdims=True))    # (Bt, 1)
        s = jnp.stack(scores, axis=0)                 # (C, Bt, 1)

    # --- softmax over the C axis (PyTorch dim=0), max-stabilized ----------------------
    m = jnp.max(s, axis=0, keepdims=True)             # (1, Bt, 1)
    e = jnp.exp(s - m)                                # (C, Bt, 1)
    denom = jnp.sum(e, axis=0, keepdims=True)         # (1, Bt, 1)
    attn = e / denom                                  # exact divide on a tiny tensor

    # --- res = (attn * x).sum(dim=0): broadcast over lanes ----------------------------
    o_ref[...] = jnp.sum(attn * x, axis=0).astype(o_ref.dtype)          # (Bt, H)


# ---------------------------------------------------------------------------------------
# Wrapper
# ---------------------------------------------------------------------------------------
def attention_query_forward(x, w1, b1, w2):
    """x: (C, B, H); w1: (H, Dq); b1: (Dq,); w2: (Dq, 1) -> (B, H)."""
    C, B, H = x.shape
    H_w, Dq = w1.shape
    assert H_w == H

    Dqp = _round_up(Dq, 128)          # pad only the tiny weights
    Hpv = _round_up(H, 128)           # VMEM lane-padding (NOT applied to x in HBM)
    B8 = _round_up(B, 8)

    # --- VMEM-budgeted tile size ------------------------------------------------------
    fixed = _fixed_vmem_bytes(H, Dqp)
    avail = max(_VMEM_WORKSET_BUDGET - fixed, 0)
    t_unchunked = max(8, _round_down(avail // _per_row_vmem_bytes(C, Hpv, Dqp, C), 8))
    t_chunked = max(8, _round_down(avail // _per_row_vmem_bytes(C, Hpv, Dqp, 1), 8))

    # Aim for >= _TARGET_STEPS grid steps when B allows (megacore + pipeline overlap),
    # but keep each x tile >= ~256 KiB so the ~0.35us/step overhead stays amortized.
    rows_min = max(8, _round_up(_cdiv(_MIN_X_TILE_BYTES, 4 * C * Hpv), 8))
    rows_for_steps = _round_up(_cdiv(B8, _TARGET_STEPS), 8)
    t = min(t_chunked, max(rows_for_steps, rows_min))

    # Balanced tiling: pad B by < n_tiles*8 rows instead of up to a whole tile.
    n_tiles = _cdiv(B8, t)
    b_tile = _round_up(_cdiv(B8, n_tiles), 8)
    Bp = n_tiles * b_tile

    chunk_c = (4 * C * b_tile * Dqp > _H_CHUNK_LIMIT) or (b_tile > t_unchunked)

    # Pad only B (tiny, padded rows contribute exactly 0 to the sliced-off output rows);
    # x's H stays unpadded so the dominant HBM read stream is not inflated.
    xp = x if Bp == B else jnp.pad(x, ((0, 0), (0, Bp - B), (0, 0)))
    w1p = jnp.pad(w1, ((0, 0), (0, Dqp - Dq)))
    b1p = jnp.pad(b1, (0, Dqp - Dq)).reshape(1, Dqp)
    w2p = jnp.pad(w2[:, 0], (0, Dqp - Dq)).reshape(1, Dqp)

    est = fixed + b_tile * _per_row_vmem_bytes(C, Hpv, Dqp, 1 if chunk_c else C)
    vmem_limit = min(48 * 1024 * 1024, max(32 * 1024 * 1024, int(1.5 * est)))

    kernel = functools.partial(attention_query_kernel, chunk_c=chunk_c)
    out_p = pl.pallas_call(
        kernel,
        out_shape=jax.ShapeDtypeStruct((Bp, H), x.dtype),
        grid=(n_tiles,),
        in_specs=[
            pl.BlockSpec((C, b_tile, H), lambda i: (0, i, 0)),   # x tile (full C resident)
            pl.BlockSpec((H, Dqp), lambda i: (0, 0)),            # w1 (whole)
            pl.BlockSpec((1, Dqp), lambda i: (0, 0)),            # b1 (whole)
            pl.BlockSpec((1, Dqp), lambda i: (0, 0)),            # w2 row (whole)
        ],
        out_specs=pl.BlockSpec((b_tile, H), lambda i: (i, 0)),
        compiler_params=pltpu.CompilerParams(
            # B-tiles are independent -> shard across TensorCores on v7x; harmless elsewhere.
            dimension_semantics=("parallel",),
            vmem_limit_bytes=vmem_limit,
        ),
    )(xp, w1p, b1p, w2p)
    return out_p[:B] if Bp != B else out_p


# ---------------------------------------------------------------------------------------
# Reference / init / test
# ---------------------------------------------------------------------------------------
def attention_query_reference(x, w1, b1, w2):
    """Pure-JAX reference matching the PyTorch forward for attn_type='query'."""
    prec = jax.lax.Precision.HIGHEST
    h = jnp.tanh(jnp.einsum("cbh,hd->cbd", x.astype(jnp.float32), w1, precision=prec) + b1)
    s = jnp.einsum("cbd,de->cbe", h, w2, precision=prec)        # (C, B, 1)
    attn = jax.nn.softmax(s, axis=0)                            # softmax over dim=0
    return jnp.sum(attn * x, axis=0).astype(x.dtype)            # (B, H)


def init_params(key, dim_hiddens, dim_query):
    """Deterministic init mirroring nn.Linear defaults (uniform +/- 1/sqrt(fan_in))."""
    k1, k2, k3 = jax.random.split(key, 3)
    bound1 = 1.0 / math.sqrt(dim_hiddens)
    bound2 = 1.0 / math.sqrt(dim_query)
    w1 = jax.random.uniform(k1, (dim_hiddens, dim_query), jnp.float32,
                            minval=-bound1, maxval=bound1)
    b1 = jax.random.uniform(k2, (dim_query,), jnp.float32,
                            minval=-bound1, maxval=bound1)
    w2 = jax.random.uniform(k3, (dim_query, 1), jnp.float32,
                            minval=-bound2, maxval=bound2)
    return w1, b1, w2


if __name__ == "__main__":
    # C = set size (softmax axis), B = batch, H = dim_hiddens, Dq = dim_query.
    C, B, H, Dq = 4, 8, 32, 16

    key = jax.random.PRNGKey(0)
    kx, kp = jax.random.split(key)
    x = jax.random.normal(kx, (C, B, H), dtype=jnp.float32)
    w1, b1, w2 = init_params(kp, H, Dq)

    out = attention_query_forward(x, w1, b1, w2)
    out = jax.block_until_ready(out)

    ref = attention_query_reference(x, w1, b1, w2)
    assert out.shape == (B, H)
    # Exact-division softmax + HIGHEST-precision dots: the only residual deltas are the
    # hardware tanh/exp approximations, comfortably inside atol=1e-4 / rtol=1e-3.
    assert jnp.allclose(out, ref, atol=1e-4, rtol=1e-3), "Pallas output mismatch vs reference"

    print("KERNEL_OK")
</pallas_src>

<mosaic_0001>
module attributes {stable_mosaic.version = 11 : i64} {
  func.func @attention_query_kernel(%arg0: i32, %arg1: memref<4x8x32xf32, #tpu.memory_space<vmem>>, %arg2: memref<32x128xf32, #tpu.memory_space<vmem>>, %arg3: memref<1x128xf32, #tpu.memory_space<vmem>>, %arg4: memref<1x128xf32, #tpu.memory_space<vmem>>, %arg5: memref<8x32xf32, #tpu.memory_space<vmem>>) attributes {dimension_semantics = [#tpu.dimension_semantics<parallel>], iteration_bounds = array<i64: 1>, scalar_prefetch = 0 : i64, scratch_operands = 0 : i64, tpu.core_type = #tpu.core_type<tc>, window_params = [{transform_indices = @transform_0, window_bounds = array<i64: 4, 8, 32>}, {pipeline_mode = #tpu.pipeline_mode<synchronous>, transform_indices = @transform_1, window_bounds = array<i64: 32, 128>}, {pipeline_mode = #tpu.pipeline_mode<synchronous>, transform_indices = @transform_2, window_bounds = array<i64: 1, 128>}, {pipeline_mode = #tpu.pipeline_mode<synchronous>, transform_indices = @transform_3, window_bounds = array<i64: 1, 128>}, {transform_indices = @transform_4, window_bounds = array<i64: 8, 32>}]} {
    %c0 = arith.constant 0 : index
    %c0_0 = arith.constant 0 : index
    %c0_1 = arith.constant 0 : index
    %0 = vector.load %arg1[%c0, %c0_0, %c0_1] : memref<4x8x32xf32, #tpu.memory_space<vmem>>, vector<4x8x32xf32>
    %c0_2 = arith.constant 0 : index
    %c0_3 = arith.constant 0 : index
    %1 = vector.load %arg2[%c0_2, %c0_3] : memref<32x128xf32, #tpu.memory_space<vmem>>, vector<32x128xf32>
    %c0_4 = arith.constant 0 : index
    %c0_5 = arith.constant 0 : index
    %2 = vector.load %arg3[%c0_4, %c0_5] : memref<1x128xf32, #tpu.memory_space<vmem>>, vector<1x128xf32>
    %c0_6 = arith.constant 0 : index
    %c0_7 = arith.constant 0 : index
    %3 = vector.load %arg4[%c0_6, %c0_7] : memref<1x128xf32, #tpu.memory_space<vmem>>, vector<1x128xf32>
    %4 = vector.shape_cast %0 : vector<4x8x32xf32> to vector<32x32xf32>
    %cst = arith.constant dense<0.000000e+00> : vector<32x128xf32>
    %5 = tpu.matmul %4, %1, %cst {dimension_numbers = #tpu.dot_dimension_numbers<[1], [0], [0], [1], [0, 0, 1, 1], [], []>, precision = #tpu.contract_precision<fp32>} : vector<32x32xf32>, vector<32x128xf32>, vector<32x128xf32> -> vector<32x128xf32>
    %6 = vector.broadcast %2 : vector<1x128xf32> to vector<32x128xf32>
    %7 = arith.addf %5, %6 : vector<32x128xf32>
    %8 = math.tanh %7 : vector<32x128xf32>
    %9 = vector.broadcast %3 : vector<1x128xf32> to vector<32x128xf32>
    %10 = arith.mulf %8, %9 : vector<32x128xf32>
    %cst_8 = arith.constant dense<0.000000e+00> : vector<32xf32>
    %11 = vector.multi_reduction <add>, %10, %cst_8 [1] : vector<32x128xf32> to vector<32xf32>
    %12 = vector.shape_cast %11 : vector<32xf32> to vector<32x1xf32>
    %13 = vector.shape_cast %12 : vector<32x1xf32> to vector<4x8x1xf32>
    %cst_9 = arith.constant dense<0xFF800000> : vector<8x1xf32>
    %14 = vector.multi_reduction <maximumf>, %13, %cst_9 [0] : vector<4x8x1xf32> to vector<8x1xf32>
    %15 = vector.shape_cast %14 : vector<8x1xf32> to vector<1x8x1xf32>
    %16 = vector.broadcast %15 : vector<1x8x1xf32> to vector<4x8x1xf32>
    %17 = arith.subf %13, %16 : vector<4x8x1xf32>
    %18 = math.exp %17 : vector<4x8x1xf32>
    %cst_10 = arith.constant dense<0.000000e+00> : vector<8x1xf32>
    %19 = vector.multi_reduction <add>, %18, %cst_10 [0] : vector<4x8x1xf32> to vector<8x1xf32>
    %20 = vector.shape_cast %19 : vector<8x1xf32> to vector<1x8x1xf32>
    %21 = vector.broadcast %20 : vector<1x8x1xf32> to vector<4x8x1xf32>
    %22 = arith.divf %18, %21 : vector<4x8x1xf32>
    %23 = vector.broadcast %22 : vector<4x8x1xf32> to vector<4x8x32xf32>
    %24 = arith.mulf %23, %0 : vector<4x8x32xf32>
    %cst_11 = arith.constant dense<0.000000e+00> : vector<8x32xf32>
    %25 = vector.multi_reduction <add>, %24, %cst_11 [0] : vector<4x8x32xf32> to vector<8x32xf32>
    %c0_12 = arith.constant 0 : index
    %c0_13 = arith.constant 0 : index
    %26 = vector.load %arg5[%c0_12, %c0_13] : memref<8x32xf32, #tpu.memory_space<vmem>>, vector<8x32xf32>
    tpu.vector_store %arg5[%c0_12, %c0_13], %25 {strides = array<i32>} : memref<8x32xf32, #tpu.memory_space<vmem>>, vector<8x32xf32>,
    return
  }
  func.func @transform_0(%arg0: i32) -> (i32, i32, i32) {
    %c0_i32 = arith.constant 0 : i32
    %c0_i32_0 = arith.constant 0 : i32
    %c0_i32_1 = arith.constant 0 : i32
    return %c0_i32, %arg0, %c0_i32_0 : i32, i32, i32
  }
  func.func @transform_1(%arg0: i32) -> (i32, i32) {
    %c0_i32 = arith.constant 0 : i32
    %c0_i32_0 = arith.constant 0 : i32
    %c0_i32_1 = arith.constant 0 : i32
    return %c0_i32, %c0_i32_0 : i32, i32
  }
  func.func @transform_2(%arg0: i32) -> (i32, i32) {
    %c0_i32 = arith.constant 0 : i32
    %c0_i32_0 = arith.constant 0 : i32
    %c0_i32_1 = arith.constant 0 : i32
    return %c0_i32, %c0_i32_0 : i32, i32
  }
  func.func @transform_3(%arg0: i32) -> (i32, i32) {
    %c0_i32 = arith.constant 0 : i32
    %c0_i32_0 = arith.constant 0 : i32
    %c0_i32_1 = arith.constant 0 : i32
    return %c0_i32, %c0_i32_0 : i32, i32
  }
  func.func @transform_4(%arg0: i32) -> (i32, i32) {
    %c0_i32 = arith.constant 0 : i32
    %c0_i32_0 = arith.constant 0 : i32
    return %arg0, %c0_i32 : i32, i32
  }
}

</mosaic_0001>

<llo_original>
// kernel: tpu_custom_call.1
$region0: #{tpu_custom_call.1}
  #allocation0 [shape = 'u32[]', space=smem, size = 0x4, offset = 0x4, fixed_abs, tag = 'smem constant byte address 0x4 - core index']
  #allocation1 [shape = 'u32[144,128]{1,0:T(1,128)}', space=vmem, size = 0x12000, scoped, tag = 'internal scratch']
  %s0 = inlined_call_operand.hbm [shape: f32[4,8,32], index: 0, kind: input, shape index: {}]
  %s1 = inlined_call_operand.hbm [shape: f32[32,128], index: 1, kind: input, shape index: {}]
  %s2 = inlined_call_operand.vmem [shape: f32[1,128], index: 2, kind: input, shape index: {}]
  %s3 = inlined_call_operand.vmem [shape: f32[1,128], index: 3, kind: input, shape index: {}]
  %s4 = inlined_call_operand.hbm [shape: f32[8,32], index: 4, kind: output, shape index: {}]
  %s5 = sld [smem:[#allocation0]]
  $region34: #{tpu_custom_call.1} parent=0
    _
  %s7 = ssub.s32 1, %s5
  %s8 = scalar_select 0, %s7, %s5
  $region1: #{tpu_custom_call.1} parent=0
    #allocation2 [shape = 'u8[16384]{0}', space=vmem, size = 0x4000, scoped, tag = 'input window, operand 0, single buffered']
    #allocation3 [shape = 's32[1]{0}', space=sflag, size = 0x4, scoped, tag = 'scoped memory for tpu_custom_call.1']
    #allocation4 [shape = 's32[1]{0}', space=sflag, size = 0x4, scoped, tag = 'scoped memory for tpu_custom_call.1']
    #allocation5 [shape = 'u8[16384]{0}', space=vmem, size = 0x4000, scoped, tag = 'input window, operand 1, single buffered']
    #allocation6 [shape = 's32[1]{0}', space=sflag, size = 0x4, scoped, tag = 'scoped memory for tpu_custom_call.1']
    #allocation7 [shape = 'u8[4096]{0}', space=vmem, size = 0x1000, scoped, tag = 'output window, operand 0, single buffered']
    %9 = vsyncpa [#allocation3], 0
    %10 = vsyncpa [#allocation6], 0
    %11 = vsyncpa [#allocation4], 0
    // Predicated region
    $region2: #{tpu_custom_call.1} parent=1 // pred_check
      _
    $region3: #{tpu_custom_call.1} parent=1 // pred_check_branch
      %13 = sbr.rel (0) target = $region5
    $region4: #{tpu_custom_call.1} parent=1 // pred_region
      %s15 = ssub.s32 512, 512
      %16 = vsyncadd [#allocation3], %s15
      %s17 = sshll.u32 [#allocation2], 4
      %s18 = int_to_ptr.vmem [resolvable:$true] %s17
      %23 = dma.hbm_to_vmem [thread:$0]  %s0, 512, %s18, [#allocation3], 128, 128, 8
    $region5: #{tpu_custom_call.1} parent=1 // pred_fallthru
      _
    // Predicated region
    $region6: #{tpu_custom_call.1} parent=1 // pred_check
      _
    $region7: #{tpu_custom_call.1} parent=1 // pred_check_branch
      %25 = sbr.rel (0) target = $region9
    $region8: #{tpu_custom_call.1} parent=1 // pred_region
      %s27 = ssub.s32 512, 512
      %28 = vsyncadd [#allocation6], %s27
      %s29 = sshll.u32 [#allocation5], 4
      %s30 = int_to_ptr.vmem [resolvable:$true] %s29
      %35 = dma.hbm_to_vmem [thread:$0]  %s1, 512, %s30, [#allocation6], 128, 128, 8
    $region9: #{tpu_custom_call.1} parent=1 // pred_fallthru
      _
    // Predicated region
    $region10: #{tpu_custom_call.1} parent=1 // pred_check
      _
    $region11: #{tpu_custom_call.1} parent=1 // pred_check_branch
      %37 = sbr.rel (0) target = $region13
    $region12: #{tpu_custom_call.1} parent=1 // pred_region
      _
    $region13: #{tpu_custom_call.1} parent=1 // pred_fallthru
      _
    // Predicated region
    $region14: #{tpu_custom_call.1} parent=1 // pred_check
      _
    $region15: #{tpu_custom_call.1} parent=1 // pred_check_branch
      %39 = sbr.rel (0) target = $region17
    $region16: #{tpu_custom_call.1} parent=1 // pred_region
      _
    $region17: #{tpu_custom_call.1} parent=1 // pred_fallthru
      _
    // Predicated region
    $region18: #{tpu_custom_call.1} parent=1 // pred_check
      _
    $region19: #{tpu_custom_call.1} parent=1 // pred_check_branch
      %41 = sbr.rel (0) target = $region21
    $region20: #{tpu_custom_call.1} parent=1 // pred_region
      %42 = dma.done [#allocation3], 512
    $region21: #{tpu_custom_call.1} parent=1 // pred_fallthru
      _
    // Predicated region
    $region22: #{tpu_custom_call.1} parent=1 // pred_check
      _
    $region23: #{tpu_custom_call.1} parent=1 // pred_check_branch
      %44 = sbr.rel (0) target = $region25
    $region24: #{tpu_custom_call.1} parent=1 // pred_region
      %45 = dma.done [#allocation6], 512
    $region25: #{tpu_custom_call.1} parent=1 // pred_fallthru
      _
    %v46 = vld [vmem:[#allocation2] sm:$0xff]
    %v47 = vld [vmem:[#allocation2 + $0x8] sm:$0xff]
    %v48 = vld [vmem:[#allocation2 + $0x10] sm:$0xff]
    %v49 = vld [vmem:[#allocation2 + $0x18] sm:$0xff]
    %v50 = vld [vmem:[#allocation5] sm:$0xff]
    %v51 = vld [vmem:[#allocation5 + $0x8] sm:$0xff]
    %v52 = vld [vmem:[#allocation5 + $0x10] sm:$0xff]
    %v53 = vld [vmem:[#allocation5 + $0x18] sm:$0xff]
    %v54 = vld [vmem:[%s2] sm:$0x1]
    %v55 = vld [vmem:[%s3] sm:$0x1]
    %v57 = vlaneseq
    %v58 = vshrl.u32 %v57, 7
    %v59 = vsub.s32 0, %v58
    %v60 = vrot.slane %v54, %v59
    %vm62 = vcmask 261120
    %v64 = vsel %vm62, %v46, 0
    %v67 = vsel %vm62, %v47, 0
    %v70 = vsel %vm62, %v48, 0
    %v73 = vsel %vm62, %v49, 0
    %75 = vmatprep.subr.mxu0 0.0
    %76 = vmatpush1.msra.mxu0 0.0
    %77 = vmatprep.subr.mxu0 0.0
    %78 = vmatpush1.msra.mxu0 0.0
    %79 = vmatprep.subr.mxu0 0.0
    %80 = vmatpush1.msra.mxu0 0.0
    %81 = vmatprep.subr.mxu0 0.0
    %82 = vmatpush1.msra.mxu0 0.0
    %83 = vmatprep.subr.mxu0 0.0
    %84 = vmatpush1.msra.mxu0 0.0
    %85 = vmatprep.subr.mxu0 0.0
    %86 = vmatpush1.msra.mxu0 0.0
    %87 = vmatprep.subr.mxu0 0.0
    %88 = vmatpush1.msra.mxu0 0.0
    %89 = vmatprep.subr.mxu0 0.0
    %90 = vmatpush1.msra.mxu0 0.0
    %91 = vmatprep.subr.mxu0 0.0
    %92 = vmatpush1.msra.mxu0 0.0
    %93 = vmatprep.subr.mxu0 0.0
    %94 = vmatpush1.msra.mxu0 0.0
    %95 = vmatprep.subr.mxu0 0.0
    %96 = vmatpush1.msra.mxu0 0.0
    %97 = vmatprep.subr.mxu0 0.0
    %98 = vmatpush1.msra.mxu0 0.0
    %99 = vmatprep.subr.mxu0 0.0
    %v100 = vand.u32 %v53, 4294901760
    %101 = vmatpush1.msra.mxu0 %v100
    %102 = vmatprep.subr.mxu0 0.0
    %v103 = vand.u32 %v52, 4294901760
    %104 = vmatpush1.msra.mxu0 %v103
    %105 = vmatprep.subr.mxu0 0.0
    %v106 = vand.u32 %v51, 4294901760
    %107 = vmatpush1.msra.mxu0 %v106
    %108 = vmatprep.subr.mxu0 0.0
    %v109 = vand.u32 %v50, 4294901760
    %110 = vmatpush1.msra.mxu0 %v109
    %111 = vmatprep.subr.mxu0 0.0
    %112 = vmatpush2.msra.mxu0 0.0
    %113 = vmatprep.subr.mxu0 0.0
    %114 = vmatpush2.msra.mxu0 0.0
    %115 = vmatprep.subr.mxu0 0.0
    %116 = vmatpush2.msra.mxu0 0.0
    %117 = vmatprep.subr.mxu0 0.0
    %118 = vmatpush2.msra.mxu0 0.0
    %119 = vmatprep.subr.mxu0 0.0
    %120 = vmatpush2.msra.mxu0 0.0
    %121 = vmatprep.subr.mxu0 0.0
    %122 = vmatpush2.msra.mxu0 0.0
    %123 = vmatprep.subr.mxu0 0.0
    %124 = vmatpush2.msra.mxu0 0.0
    %125 = vmatprep.subr.mxu0 0.0
    %126 = vmatpush2.msra.mxu0 0.0
    %127 = vmatprep.subr.mxu0 0.0
    %128 = vmatpush2.msra.mxu0 0.0
    %129 = vmatprep.subr.mxu0 0.0
    %130 = vmatpush2.msra.mxu0 0.0
    %131 = vmatprep.subr.mxu0 0.0
    %132 = vmatpush2.msra.mxu0 0.0
    %133 = vmatprep.subr.mxu0 0.0
    %134 = vmatpush2.msra.mxu0 0.0
    %135 = vmatprep.subr.mxu0 0.0
    %136 = vmatpush2.msra.mxu0 0.0
    %137 = vmatprep.subr.mxu0 0.0
    %138 = vmatpush2.msra.mxu0 0.0
    %139 = vmatprep.subr.mxu0 0.0
    %140 = vmatpush2.msra.mxu0 0.0
    %141 = vmatprep.subr.mxu0 0.0
    %142 = vmatpush2.msra.mxu0 0.0
    %143 = vmatprep.mubr.f32.mxu0 0.0
    %v144 = vand.u32 %v64, 4294901760
    %v145 = vsub.f32 %v64, %v144
    %v146 = vand.u32 %v145, 4294901760
    %v147 = vsub.f32 %v145, %v146
    %v148 = vand.u32 %v147, 4294901760
    %149 = vmatmul.mubr.f32.gmra.mxu0 %v148
    %v150 = vpop.f32.mrf.mxu0
    %v151 = vadd.f32 %v60, %v150
    %v152 = vpop.f32.mrf.mxu0
    %153 = vmatprep.mubr.f32.mxu0 0.0
    %v154 = vand.u32 %v67, 4294901760
    %v155 = vsub.f32 %v67, %v154
    %v156 = vand.u32 %v155, 4294901760
    %v157 = vsub.f32 %v155, %v156
    %v158 = vand.u32 %v157, 4294901760
    %159 = vmatmul.mubr.f32.gmra.mxu0 %v158
    %v160 = vpop.f32.mrf.mxu0
    %v161 = vadd.f32 %v60, %v160
    %v162 = vpop.f32.mrf.mxu0
    %163 = vmatprep.mubr.f32.mxu0 0.0
    %v164 = vand.u32 %v70, 4294901760
    %v165 = vsub.f32 %v70, %v164
    %v166 = vand.u32 %v165, 4294901760
    %v167 = vsub.f32 %v165, %v166
    %v168 = vand.u32 %v167, 4294901760
    %169 = vmatmul.mubr.f32.gmra.mxu0 %v168
    %v170 = vpop.f32.mrf.mxu0
    %v171 = vadd.f32 %v60, %v170
    %v172 = vpop.f32.mrf.mxu0
    %173 = vmatprep.mubr.f32.mxu0 0.0
    %v174 = vand.u32 %v73, 4294901760
    %v175 = vsub.f32 %v73, %v174
    %v176 = vand.u32 %v175, 4294901760
    %v177 = vsub.f32 %v175, %v176
    %v178 = vand.u32 %v177, 4294901760
    %179 = vmatmul.mubr.f32.gmra.mxu0 %v178
    %v180 = vpop.f32.mrf.mxu0
    %v181 = vadd.f32 %v60, %v180
    %v182 = vpop.f32.mrf.mxu0
    %183 = vdwg.mxu0
    %184 = vmatprep.subr.mxu0 0.0
    %185 = vmatpush1.msra.mxu0 0.0
    %186 = vmatprep.subr.mxu0 0.0
    %187 = vmatpush1.msra.mxu0 0.0
    %188 = vmatprep.subr.mxu0 0.0
    %189 = vmatpush1.msra.mxu0 0.0
    %190 = vmatprep.subr.mxu0 0.0
    %191 = vmatpush1.msra.mxu0 0.0
    %192 = vmatprep.subr.mxu0 0.0
    %193 = vmatpush1.msra.mxu0 0.0
    %194 = vmatprep.subr.mxu0 0.0
    %195 = vmatpush1.msra.mxu0 0.0
    %196 = vmatprep.subr.mxu0 0.0
    %197 = vmatpush1.msra.mxu0 0.0
    %198 = vmatprep.subr.mxu0 0.0
    %199 = vmatpush1.msra.mxu0 0.0
    %200 = vmatprep.subr.mxu0 0.0
    %201 = vmatpush1.msra.mxu0 0.0
    %202 = vmatprep.subr.mxu0 0.0
    %203 = vmatpush1.msra.mxu0 0.0
    %204 = vmatprep.subr.mxu0 0.0
    %205 = vmatpush1.msra.mxu0 0.0
    %206 = vmatprep.subr.mxu0 0.0
    %207 = vmatpush1.msra.mxu0 0.0
    %208 = vmatprep.subr.mxu0 0.0
    %v209 = vand.u32 %v53, 4294901760
    %v210 = vsub.f32 %v53, %v209
    %v211 = vand.u32 %v210, 4294901760
    %v212 = vsub.f32 %v210, %v211
    %v213 = vand.u32 %v212, 4294901760
    %214 = vmatpush1.msra.mxu0 %v213
    %215 = vmatprep.subr.mxu0 0.0
    %v216 = vand.u32 %v52, 4294901760
    %v217 = vsub.f32 %v52, %v216
    %v218 = vand.u32 %v217, 4294901760
    %v219 = vsub.f32 %v217, %v218
    %v220 = vand.u32 %v219, 4294901760
    %221 = vmatpush1.msra.mxu0 %v220
    %222 = vmatprep.subr.mxu0 0.0
    %v223 = vand.u32 %v51, 4294901760
    %v224 = vsub.f32 %v51, %v223
    %v225 = vand.u32 %v224, 4294901760
    %v226 = vsub.f32 %v224, %v225
    %v227 = vand.u32 %v226, 4294901760
    %228 = vmatpush1.msra.mxu0 %v227
    %229 = vmatprep.subr.mxu0 0.0
    %v230 = vand.u32 %v50, 4294901760
    %v231 = vsub.f32 %v50, %v230
    %v232 = vand.u32 %v231, 4294901760
    %v233 = vsub.f32 %v231, %v232
    %v234 = vand.u32 %v233, 4294901760
    %235 = vmatpush1.msra.mxu0 %v234
    %236 = vmatprep.subr.mxu0 0.0
    %237 = vmatpush2.msra.mxu0 0.0
    %238 = vmatprep.subr.mxu0 0.0
    %239 = vmatpush2.msra.mxu0 0.0
    %240 = vmatprep.subr.mxu0 0.0
    %241 = vmatpush2.msra.mxu0 0.0
    %242 = vmatprep.subr.mxu0 0.0
    %243 = vmatpush2.msra.mxu0 0.0
    %244 = vmatprep.subr.mxu0 0.0
    %245 = vmatpush2.msra.mxu0 0.0
    %246 = vmatprep.subr.mxu0 0.0
    %247 = vmatpush2.msra.mxu0 0.0
    %248 = vmatprep.subr.mxu0 0.0
    %249 = vmatpush2.msra.mxu0 0.0
    %250 = vmatprep.subr.mxu0 0.0
    %251 = vmatpush2.msra.mxu0 0.0
    %252 = vmatprep.subr.mxu0 0.0
    %253 = vmatpush2.msra.mxu0 0.0
    %254 = vmatprep.subr.mxu0 0.0
    %255 = vmatpush2.msra.mxu0 0.0
    %256 = vmatprep.subr.mxu0 0.0
    %257 = vmatpush2.msra.mxu0 0.0
    %258 = vmatprep.subr.mxu0 0.0
    %259 = vmatpush2.msra.mxu0 0.0
    %260 = vmatprep.subr.mxu0 0.0
    %261 = vmatpush2.msra.mxu0 0.0
    %262 = vmatprep.subr.mxu0 0.0
    %263 = vmatpush2.msra.mxu0 0.0
    %264 = vmatprep.subr.mxu0 0.0
    %265 = vmatpush2.msra.mxu0 0.0
    %266 = vmatprep.subr.mxu0 0.0
    %267 = vmatpush2.msra.mxu0 0.0
    %268 = vmatprep.mubr.f32.mxu0 0.0
    %v269 = vand.u32 %v64, 4294901760
    %270 = vmatmul.mubr.f32.gmra.mxu0 %v269
    %v271 = vpop.f32.mrf.mxu0
    %v272 = vadd.f32 %v151, %v271
    %v273 = vpop.f32.mrf.mxu0
    %274 = vmatprep.mubr.f32.mxu0 0.0
    %v275 = vand.u32 %v67, 4294901760
    %276 = vmatmul.mubr.f32.gmra.mxu0 %v275
    %v277 = vpop.f32.mrf.mxu0
    %v278 = vadd.f32 %v161, %v277
    %v279 = vpop.f32.mrf.mxu0
    %280 = vmatprep.mubr.f32.mxu0 0.0
    %v281 = vand.u32 %v70, 4294901760
    %282 = vmatmul.mubr.f32.gmra.mxu0 %v281
    %v283 = vpop.f32.mrf.mxu0
    %v284 = vadd.f32 %v171, %v283
    %v285 = vpop.f32.mrf.mxu0
    %286 = vmatprep.mubr.f32.mxu0 0.0
    %v287 = vand.u32 %v73, 4294901760
    %288 = vmatmul.mubr.f32.gmra.mxu0 %v287
    %v289 = vpop.f32.mrf.mxu0
    %v290 = vadd.f32 %v181, %v289
    %v291 = vpop.f32.mrf.mxu0
    %292 = vdwg.mxu0
    %293 = vmatprep.subr.mxu0 0.0
    %294 = vmatpush1.msra.mxu0 0.0
    %295 = vmatprep.subr.mxu0 0.0
    %296 = vmatpush1.msra.mxu0 0.0
    %297 = vmatprep.subr.mxu0 0.0
    %298 = vmatpush1.msra.mxu0 0.0
    %299 = vmatprep.subr.mxu0 0.0
    %300 = vmatpush1.msra.mxu0 0.0
    %301 = vmatprep.subr.mxu0 0.0
    %302 = vmatpush1.msra.mxu0 0.0
    %303 = vmatprep.subr.mxu0 0.0
    %304 = vmatpush1.msra.mxu0 0.0
    %305 = vmatprep.subr.mxu0 0.0
    %306 = vmatpush1.msra.mxu0 0.0
    %307 = vmatprep.subr.mxu0 0.0
    %308 = vmatpush1.msra.mxu0 0.0
    %309 = vmatprep.subr.mxu0 0.0
    %310 = vmatpush1.msra.mxu0 0.0
    %311 = vmatprep.subr.mxu0 0.0
    %312 = vmatpush1.msra.mxu0 0.0
    %313 = vmatprep.subr.mxu0 0.0
    %314 = vmatpush1.msra.mxu0 0.0
    %315 = vmatprep.subr.mxu0 0.0
    %316 = vmatpush1.msra.mxu0 0.0
    %317 = vmatprep.subr.mxu0 0.0
    %v318 = vand.u32 %v53, 4294901760
    %v319 = vsub.f32 %v53, %v318
    %320 = vmatpush1.msra.mxu0 %v319
    %321 = vmatprep.subr.mxu0 0.0
    %v322 = vand.u32 %v52, 4294901760
    %v323 = vsub.f32 %v52, %v322
    %324 = vmatpush1.msra.mxu0 %v323
    %325 = vmatprep.subr.mxu0 0.0
    %v326 = vand.u32 %v51, 4294901760
    %v327 = vsub.f32 %v51, %v326
    %328 = vmatpush1.msra.mxu0 %v327
    %329 = vmatprep.subr.mxu0 0.0
    %v330 = vand.u32 %v50, 4294901760
    %v331 = vsub.f32 %v50, %v330
    %332 = vmatpush1.msra.mxu0 %v331
    %333 = vmatprep.subr.mxu0 0.0
    %334 = vmatpush2.msra.mxu0 0.0
    %335 = vmatprep.subr.mxu0 0.0
    %336 = vmatpush2.msra.mxu0 0.0
    %337 = vmatprep.subr.mxu0 0.0
    %338 = vmatpush2.msra.mxu0 0.0
    %339 = vmatprep.subr.mxu0 0.0
    %340 = vmatpush2.msra.mxu0 0.0
    %341 = vmatprep.subr.mxu0 0.0
    %342 = vmatpush2.msra.mxu0 0.0
    %343 = vmatprep.subr.mxu0 0.0
    %344 = vmatpush2.msra.mxu0 0.0
    %345 = vmatprep.subr.mxu0 0.0
    %346 = vmatpush2.msra.mxu0 0.0
    %347 = vmatprep.subr.mxu0 0.0
    %348 = vmatpush2.msra.mxu0 0.0
    %349 = vmatprep.subr.mxu0 0.0
    %350 = vmatpush2.msra.mxu0 0.0
    %351 = vmatprep.subr.mxu0 0.0
    %352 = vmatpush2.msra.mxu0 0.0
    %353 = vmatprep.subr.mxu0 0.0
    %354 = vmatpush2.msra.mxu0 0.0
    %355 = vmatprep.subr.mxu0 0.0
    %356 = vmatpush2.msra.mxu0 0.0
    %357 = vmatprep.subr.mxu0 0.0
    %358 = vmatpush2.msra.mxu0 0.0
    %359 = vmatprep.subr.mxu0 0.0
    %360 = vmatpush2.msra.mxu0 0.0
    %361 = vmatprep.subr.mxu0 0.0
    %362 = vmatpush2.msra.mxu0 0.0
    %363 = vmatprep.subr.mxu0 0.0
    %364 = vmatpush2.msra.mxu0 0.0
    %365 = vmatprep.mubr.f32.mxu0 0.0
    %v366 = vand.u32 %v64, 4294901760
    %v367 = vsub.f32 %v64, %v366
    %368 = vmatmul.mubr.f32.gmra.mxu0 %v367
    %v369 = vpop.f32.mrf.mxu0
    %v370 = vadd.f32 %v272, %v369
    %v371 = vpop.f32.mrf.mxu0
    %372 = vmatprep.mubr.f32.mxu0 0.0
    %v373 = vand.u32 %v67, 4294901760
    %v374 = vsub.f32 %v67, %v373
    %375 = vmatmul.mubr.f32.gmra.mxu0 %v374
    %v376 = vpop.f32.mrf.mxu0
    %v377 = vadd.f32 %v278, %v376
    %v378 = vpop.f32.mrf.mxu0
    %379 = vmatprep.mubr.f32.mxu0 0.0
    %v380 = vand.u32 %v70, 4294901760
    %v381 = vsub.f32 %v70, %v380
    %382 = vmatmul.mubr.f32.gmra.mxu0 %v381
    %v383 = vpop.f32.mrf.mxu0
    %v384 = vadd.f32 %v284, %v383
    %v385 = vpop.f32.mrf.mxu0
    %386 = vmatprep.mubr.f32.mxu0 0.0
    %v387 = vand.u32 %v73, 4294901760
    %v388 = vsub.f32 %v73, %v387
    %389 = vmatmul.mubr.f32.gmra.mxu0 %v388
    %v390 = vpop.f32.mrf.mxu0
    %v391 = vadd.f32 %v290, %v390
    %v392 = vpop.f32.mrf.mxu0
    %393 = vdwg.mxu0
    %394 = vmatprep.subr.mxu0 0.0
    %395 = vmatpush1.msra.mxu0 0.0
    %396 = vmatprep.subr.mxu0 0.0
    %397 = vmatpush1.msra.mxu0 0.0
    %398 = vmatprep.subr.mxu0 0.0
    %399 = vmatpush1.msra.mxu0 0.0
    %400 = vmatprep.subr.mxu0 0.0
    %401 = vmatpush1.msra.mxu0 0.0
    %402 = vmatprep.subr.mxu0 0.0
    %403 = vmatpush1.msra.mxu0 0.0
    %404 = vmatprep.subr.mxu0 0.0
    %405 = vmatpush1.msra.mxu0 0.0
    %406 = vmatprep.subr.mxu0 0.0
    %407 = vmatpush1.msra.mxu0 0.0
    %408 = vmatprep.subr.mxu0 0.0
    %409 = vmatpush1.msra.mxu0 0.0
    %410 = vmatprep.subr.mxu0 0.0
    %411 = vmatpush1.msra.mxu0 0.0
    %412 = vmatprep.subr.mxu0 0.0
    %413 = vmatpush1.msra.mxu0 0.0
    %414 = vmatprep.subr.mxu0 0.0
    %415 = vmatpush1.msra.mxu0 0.0
    %416 = vmatprep.subr.mxu0 0.0
    %417 = vmatpush1.msra.mxu0 0.0
    %418 = vmatprep.subr.mxu0 0.0
    %v419 = vand.u32 %v53, 4294901760
    %420 = vmatpush1.msra.mxu0 %v419
    %421 = vmatprep.subr.mxu0 0.0
    %v422 = vand.u32 %v52, 4294901760
    %423 = vmatpush1.msra.mxu0 %v422
    %424 = vmatprep.subr.mxu0 0.0
    %v425 = vand.u32 %v51, 4294901760
    %426 = vmatpush1.msra.mxu0 %v425
    %427 = vmatprep.subr.mxu0 0.0
    %v428 = vand.u32 %v50, 4294901760
    %429 = vmatpush1.msra.mxu0 %v428
    %430 = vmatprep.subr.mxu0 0.0
    %431 = vmatpush2.msra.mxu0 0.0
    %432 = vmatprep.subr.mxu0 0.0
    %433 = vmatpush2.msra.mxu0 0.0
    %434 = vmatprep.subr.mxu0 0.0
    %435 = vmatpush2.msra.mxu0 0.0
    %436 = vmatprep.subr.mxu0 0.0
    %437 = vmatpush2.msra.mxu0 0.0
    %438 = vmatprep.subr.mxu0 0.0
    %439 = vmatpush2.msra.mxu0 0.0
    %440 = vmatprep.subr.mxu0 0.0
    %441 = vmatpush2.msra.mxu0 0.0
    %442 = vmatprep.subr.mxu0 0.0
    %443 = vmatpush2.msra.mxu0 0.0
    %444 = vmatprep.subr.mxu0 0.0
    %445 = vmatpush2.msra.mxu0 0.0
    %446 = vmatprep.subr.mxu0 0.0
    %447 = vmatpush2.msra.mxu0 0.0
    %448 = vmatprep.subr.mxu0 0.0
    %449 = vmatpush2.msra.mxu0 0.0
    %450 = vmatprep.subr.mxu0 0.0
    %451 = vmatpush2.msra.mxu0 0.0
    %452 = vmatprep.subr.mxu0 0.0
    %453 = vmatpush2.msra.mxu0 0.0
    %454 = vmatprep.subr.mxu0 0.0
    %455 = vmatpush2.msra.mxu0 0.0
    %456 = vmatprep.subr.mxu0 0.0
    %457 = vmatpush2.msra.mxu0 0.0
    %458 = vmatprep.subr.mxu0 0.0
    %459 = vmatpush2.msra.mxu0 0.0
    %460 = vmatprep.subr.mxu0 0.0
    %461 = vmatpush2.msra.mxu0 0.0
    %462 = vmatprep.mubr.f32.mxu0 0.0
    %v463 = vand.u32 %v64, 4294901760
    %v464 = vsub.f32 %v64, %v463
    %v465 = vand.u32 %v464, 4294901760
    %466 = vmatmul.mubr.f32.gmra.mxu0 %v465
    %v467 = vpop.f32.mrf.mxu0
    %v468 = vadd.f32 %v370, %v467
    %v469 = vpop.f32.mrf.mxu0
    %470 = vmatprep.mubr.f32.mxu0 0.0
    %v471 = vand.u32 %v67, 4294901760
    %v472 = vsub.f32 %v67, %v471
    %v473 = vand.u32 %v472, 4294901760
    %474 = vmatmul.mubr.f32.gmra.mxu0 %v473
    %v475 = vpop.f32.mrf.mxu0
    %v476 = vadd.f32 %v377, %v475
    %v477 = vpop.f32.mrf.mxu0
    %478 = vmatprep.mubr.f32.mxu0 0.0
    %v479 = vand.u32 %v70, 4294901760
    %v480 = vsub.f32 %v70, %v479
    %v481 = vand.u32 %v480, 4294901760
    %482 = vmatmul.mubr.f32.gmra.mxu0 %v481
    %v483 = vpop.f32.mrf.mxu0
    %v484 = vadd.f32 %v384, %v483
    %v485 = vpop.f32.mrf.mxu0
    %486 = vmatprep.mubr.f32.mxu0 0.0
    %v487 = vand.u32 %v73, 4294901760
    %v488 = vsub.f32 %v73, %v487
    %v489 = vand.u32 %v488, 4294901760
    %490 = vmatmul.mubr.f32.gmra.mxu0 %v489
    %v491 = vpop.f32.mrf.mxu0
    %v492 = vadd.f32 %v391, %v491
    %v493 = vpop.f32.mrf.mxu0
    %494 = vdwg.mxu0
    %495 = vmatprep.subr.mxu0 0.0
    %496 = vmatpush1.msra.mxu0 0.0
    %497 = vmatprep.subr.mxu0 0.0
    %498 = vmatpush1.msra.mxu0 0.0
    %499 = vmatprep.subr.mxu0 0.0
    %500 = vmatpush1.msra.mxu0 0.0
    %501 = vmatprep.subr.mxu0 0.0
    %502 = vmatpush1.msra.mxu0 0.0
    %503 = vmatprep.subr.mxu0 0.0
    %504 = vmatpush1.msra.mxu0 0.0
    %505 = vmatprep.subr.mxu0 0.0
    %506 = vmatpush1.msra.mxu0 0.0
    %507 = vmatprep.subr.mxu0 0.0
    %508 = vmatpush1.msra.mxu0 0.0
    %509 = vmatprep.subr.mxu0 0.0
    %510 = vmatpush1.msra.mxu0 0.0
    %511 = vmatprep.subr.mxu0 0.0
    %512 = vmatpush1.msra.mxu0 0.0
    %513 = vmatprep.subr.mxu0 0.0
    %514 = vmatpush1.msra.mxu0 0.0
    %515 = vmatprep.subr.mxu0 0.0
    %516 = vmatpush1.msra.mxu0 0.0
    %517 = vmatprep.subr.mxu0 0.0
    %518 = vmatpush1.msra.mxu0 0.0
    %519 = vmatprep.subr.mxu0 0.0
    %v520 = vand.u32 %v53, 4294901760
    %v521 = vsub.f32 %v53, %v520
    %v522 = vand.u32 %v521, 4294901760
    %523 = vmatpush1.msra.mxu0 %v522
    %524 = vmatprep.subr.mxu0 0.0
    %v525 = vand.u32 %v52, 4294901760
    %v526 = vsub.f32 %v52, %v525
    %v527 = vand.u32 %v526, 4294901760
    %528 = vmatpush1.msra.mxu0 %v527
    %529 = vmatprep.subr.mxu0 0.0
    %v530 = vand.u32 %v51, 4294901760
    %v531 = vsub.f32 %v51, %v530
    %v532 = vand.u32 %v531, 4294901760
    %533 = vmatpush1.msra.mxu0 %v532
    %534 = vmatprep.subr.mxu0 0.0
    %v535 = vand.u32 %v50, 4294901760
    %v536 = vsub.f32 %v50, %v535
    %v537 = vand.u32 %v536, 4294901760
    %538 = vmatpush1.msra.mxu0 %v537
    %539 = vmatprep.subr.mxu0 0.0
    %540 = vmatpush2.msra.mxu0 0.0
    %541 = vmatprep.subr.mxu0 0.0
    %542 = vmatpush2.msra.mxu0 0.0
    %543 = vmatprep.subr.mxu0 0.0
    %544 = vmatpush2.msra.mxu0 0.0
    %545 = vmatprep.subr.mxu0 0.0
    %546 = vmatpush2.msra.mxu0 0.0
    %547 = vmatprep.subr.mxu0 0.0
    %548 = vmatpush2.msra.mxu0 0.0
    %549 = vmatprep.subr.mxu0 0.0
    %550 = vmatpush2.msra.mxu0 0.0
    %551 = vmatprep.subr.mxu0 0.0
    %552 = vmatpush2.msra.mxu0 0.0
    %553 = vmatprep.subr.mxu0 0.0
    %554 = vmatpush2.msra.mxu0 0.0
    %555 = vmatprep.subr.mxu0 0.0
    %556 = vmatpush2.msra.mxu0 0.0
    %557 = vmatprep.subr.mxu0 0.0
    %558 = vmatpush2.msra.mxu0 0.0
    %559 = vmatprep.subr.mxu0 0.0
    %560 = vmatpush2.msra.mxu0 0.0
    %561 = vmatprep.subr.mxu0 0.0
    %562 = vmatpush2.msra.mxu0 0.0
    %563 = vmatprep.subr.mxu0 0.0
    %564 = vmatpush2.msra.mxu0 0.0
    %565 = vmatprep.subr.mxu0 0.0
    %566 = vmatpush2.msra.mxu0 0.0
    %567 = vmatprep.subr.mxu0 0.0
    %568 = vmatpush2.msra.mxu0 0.0
    %569 = vmatprep.subr.mxu0 0.0
    %570 = vmatpush2.msra.mxu0 0.0
    %571 = vmatprep.mubr.f32.mxu0 0.0
    %v572 = vand.u32 %v64, 4294901760
    %573 = vmatmul.mubr.f32.gmra.mxu0 %v572
    %v574 = vpop.f32.mrf.mxu0
    %v575 = vadd.f32 %v468, %v574
    %v576 = vpop.f32.mrf.mxu0
    %577 = vmatprep.mubr.f32.mxu0 0.0
    %v578 = vand.u32 %v67, 4294901760
    %579 = vmatmul.mubr.f32.gmra.mxu0 %v578
    %v580 = vpop.f32.mrf.mxu0
    %v581 = vadd.f32 %v476, %v580
    %v582 = vpop.f32.mrf.mxu0
    %583 = vmatprep.mubr.f32.mxu0 0.0
    %v584 = vand.u32 %v70, 4294901760
    %585 = vmatmul.mubr.f32.gmra.mxu0 %v584
    %v586 = vpop.f32.mrf.mxu0
    %v587 = vadd.f32 %v484, %v586
    %v588 = vpop.f32.mrf.mxu0
    %589 = vmatprep.mubr.f32.mxu0 0.0
    %v590 = vand.u32 %v73, 4294901760
    %591 = vmatmul.mubr.f32.gmra.mxu0 %v590
    %v592 = vpop.f32.mrf.mxu0
    %v593 = vadd.f32 %v492, %v592
    %v594 = vpop.f32.mrf.mxu0
    %595 = vdwg.mxu0
    %596 = vmatprep.subr.mxu0 0.0
    %597 = vmatpush1.msra.mxu0 0.0
    %598 = vmatprep.subr.mxu0 0.0
    %599 = vmatpush1.msra.mxu0 0.0
    %600 = vmatprep.subr.mxu0 0.0
    %601 = vmatpush1.msra.mxu0 0.0
    %602 = vmatprep.subr.mxu0 0.0
    %603 = vmatpush1.msra.mxu0 0.0
    %604 = vmatprep.subr.mxu0 0.0
    %605 = vmatpush1.msra.mxu0 0.0
    %606 = vmatprep.subr.mxu0 0.0
    %607 = vmatpush1.msra.mxu0 0.0
    %608 = vmatprep.subr.mxu0 0.0
    %609 = vmatpush1.msra.mxu0 0.0
    %610 = vmatprep.subr.mxu0 0.0
    %611 = vmatpush1.msra.mxu0 0.0
    %612 = vmatprep.subr.mxu0 0.0
    %613 = vmatpush1.msra.mxu0 0.0
    %614 = vmatprep.subr.mxu0 0.0
    %615 = vmatpush1.msra.mxu0 0.0
    %616 = vmatprep.subr.mxu0 0.0
    %617 = vmatpush1.msra.mxu0 0.0
    %618 = vmatprep.subr.mxu0 0.0
    %619 = vmatpush1.msra.mxu0 0.0
    %620 = vmatprep.subr.mxu0 0.0
    %v621 = vand.u32 %v53, 4294901760
    %622 = vmatpush1.msra.mxu0 %v621
    %623 = vmatprep.subr.mxu0 0.0
    %v624 = vand.u32 %v52, 4294901760
    %625 = vmatpush1.msra.mxu0 %v624
    %626 = vmatprep.subr.mxu0 0.0
    %v627 = vand.u32 %v51, 4294901760
    %628 = vmatpush1.msra.mxu0 %v627
    %629 = vmatprep.subr.mxu0 0.0
    %v630 = vand.u32 %v50, 4294901760
    %631 = vmatpush1.msra.mxu0 %v630
    %632 = vmatprep.subr.mxu0 0.0
    %633 = vmatpush2.msra.mxu0 0.0
    %634 = vmatprep.subr.mxu0 0.0
    %635 = vmatpush2.msra.mxu0 0.0
    %636 = vmatprep.subr.mxu0 0.0
    %637 = vmatpush2.msra.mxu0 0.0
    %638 = vmatprep.subr.mxu0 0.0
    %639 = vmatpush2.msra.mxu0 0.0
    %640 = vmatprep.subr.mxu0 0.0
    %641 = vmatpush2.msra.mxu0 0.0
    %642 = vmatprep.subr.mxu0 0.0
    %643 = vmatpush2.msra.mxu0 0.0
    %644 = vmatprep.subr.mxu0 0.0
    %645 = vmatpush2.msra.mxu0 0.0
    %646 = vmatprep.subr.mxu0 0.0
    %647 = vmatpush2.msra.mxu0 0.0
    %648 = vmatprep.subr.mxu0 0.0
    %649 = vmatpush2.msra.mxu0 0.0
    %650 = vmatprep.subr.mxu0 0.0
    %651 = vmatpush2.msra.mxu0 0.0
    %652 = vmatprep.subr.mxu0 0.0
    %653 = vmatpush2.msra.mxu0 0.0
    %654 = vmatprep.subr.mxu0 0.0
    %655 = vmatpush2.msra.mxu0 0.0
    %656 = vmatprep.subr.mxu0 0.0
    %657 = vmatpush2.msra.mxu0 0.0
    %658 = vmatprep.subr.mxu0 0.0
    %659 = vmatpush2.msra.mxu0 0.0
    %660 = vmatprep.subr.mxu0 0.0
    %661 = vmatpush2.msra.mxu0 0.0
    %662 = vmatprep.subr.mxu0 0.0
    %663 = vmatpush2.msra.mxu0 0.0
    %664 = vmatprep.mubr.f32.mxu0 0.0
    %v665 = vand.u32 %v64, 4294901760
    %666 = vmatmul.mubr.f32.gmra.mxu0 %v665
    %v667 = vpop.f32.mrf.mxu0
    %v668 = vadd.f32 %v575, %v667
    %v669 = vpop.f32.mrf.mxu0
    %670 = vmatprep.mubr.f32.mxu0 0.0
    %v671 = vand.u32 %v67, 4294901760
    %672 = vmatmul.mubr.f32.gmra.mxu0 %v671
    %v673 = vpop.f32.mrf.mxu0
    %v674 = vadd.f32 %v581, %v673
    %v675 = vpop.f32.mrf.mxu0
    %676 = vmatprep.mubr.f32.mxu0 0.0
    %v677 = vand.u32 %v70, 4294901760
    %678 = vmatmul.mubr.f32.gmra.mxu0 %v677
    %v679 = vpop.f32.mrf.mxu0
    %v680 = vadd.f32 %v587, %v679
    %v681 = vpop.f32.mrf.mxu0
    %682 = vmatprep.mubr.f32.mxu0 0.0
    %v683 = vand.u32 %v73, 4294901760
    %684 = vmatmul.mubr.f32.gmra.mxu0 %v683
    %v685 = vpop.f32.mrf.mxu0
    %v686 = vadd.f32 %v593, %v685
    %v687 = vpop.f32.mrf.mxu0
    %688 = vdwg.mxu0
    %v689 = vtanh.pop %v668
    %v690 = vtanh.pop %v674
    %v691 = vtanh.pop %v680
    %v692 = vtanh.pop %v686
    %v694 = vlaneseq
    %v695 = vshrl.u32 %v694, 7
    %v696 = vsub.s32 0, %v695
    %v697 = vrot.slane %v55, %v696
    %v699 = vmul.f32 %v689, %v697
    %v700 = vmul.f32 %v690, %v697
    %v701 = vmul.f32 %v691, %v697
    %v702 = vmul.f32 %v692, %v697
    %703 = vadd.xlane.f32.xlu0 %v699
    %v704 = vpop.xlane.xlu0 %703
    %705 = vadd.xlane.f32.xlu0 %v700
    %v706 = vpop.xlane.xlu0 %705
    %707 = vadd.xlane.f32.xlu0 %v701
    %v708 = vpop.xlane.xlu0 %707
    %709 = vadd.xlane.f32.xlu0 %v702
    %v710 = vpop.xlane.xlu0 %709
    %v711 = vmax.f32 %v704, %v706
    %v712 = vmax.f32 %v708, %v710
    %v713 = vmax.f32 %v711, %v712
    %v714 = vsub.f32 %v704, %v713
    %v715 = vsub.f32 %v706, %v713
    %v716 = vsub.f32 %v708, %v713
    %v717 = vsub.f32 %v710, %v713
    %v718 = vmul.f32 %v714, 1.442695
    %v719 = vpow.pop %v718
    %v720 = vmul.f32 %v715, 1.442695
    %v721 = vpow.pop %v720
    %v722 = vmul.f32 %v716, 1.442695
    %v723 = vpow.pop %v722
    %v724 = vmul.f32 %v717, 1.442695
    %v725 = vpow.pop %v724
    %v726 = vadd.f32 %v719, %v721
    %v727 = vadd.f32 %v726, %v723
    %v728 = vadd.f32 %v727, %v725
    %v729 = vrcp.pop %v728
    %v730 = vmul.f32 %v719, %v729
    %v731 = vmul.f32 %v721, %v729
    %v732 = vmul.f32 %v723, %v729
    %v733 = vmul.f32 %v725, %v729
    %v734 = vmul.f32 %v730, %v46
    %v735 = vmul.f32 %v731, %v47
    %v736 = vmul.f32 %v732, %v48
    %v737 = vmul.f32 %v733, %v49
    %v738 = vsel %vm62, %v734, 0.0
    %v739 = vsel %vm62, %v735, 0.0
    %v740 = vadd.f32 %v738, %v739
    %v741 = vsel %vm62, %v736, 0.0
    %v742 = vadd.f32 %v740, %v741
    %v743 = vsel %vm62, %v737, 0.0
    %v744 = vadd.f32 %v742, %v743
    %745 = vst.msk [vmem:[#allocation7] sm:$0xff] %vm62, %v744
    // Predicated region
    $region26: #{tpu_custom_call.1} parent=1 // pred_check
      _
    $region27: #{tpu_custom_call.1} parent=1 // pred_check_branch
      %747 = sbr.rel (0) target = $region29
    $region28: #{tpu_custom_call.1} parent=1 // pred_region
      %s749 = ssub.s32 128, 128
      %750 = vsyncadd [#allocation4], %s749
      %s752 = sshll.u32 [#allocation7], 4
      %s753 = int_to_ptr.vmem [resolvable:$true] %s752
      %755 = dma.vmem_to_hbm [thread:$0]  %s753, 128, %s4, [#allocation4]
    $region29: #{tpu_custom_call.1} parent=1 // pred_fallthru
      _
    // Predicated region
    $region30: #{tpu_custom_call.1} parent=1 // pred_check
      _
    $region31: #{tpu_custom_call.1} parent=1 // pred_check_branch
      %757 = sbr.rel (0) target = $region33
    $region32: #{tpu_custom_call.1} parent=1 // pred_region
      %758 = dma.done [#allocation4], 128
    $region33: #{tpu_custom_call.1} parent=1 // pred_fallthru
      _
    %759 = vsyncpa [#allocation3], 1
    %760 = vsyncpa [#allocation6], 1
    %761 = vsyncpa [#allocation4], 1

</llo_original>
